<compile_context>
chip_gen: v7x
topology: tpu7x:2x2x1
jax: 0.10.0
libtpu: 0.0.40
codegen_flags: <defaults>
</compile_context>

<pallas_src>
import functools

import numpy as np

import jax
import jax.numpy as jnp
from jax.experimental import pallas as pl
from jax.experimental.pallas import tpu as pltpu


def _round_up(v, m):
    return -(-v // m) * m


def _edge_mask_kernel(x_ref, halo_ref, *out_refs, kernel_size, H, W, tile_rows,
                      w_pad, mask_rows, mask_cols, wrap_mask, out_dtype):
    """Process one (tile_rows, w_pad) row-tile of one batch element.

    x_ref    : (1, TH, Wp)            tile of the raw mask (may overhang H/W)
    halo_ref : (n_t, 1, 2*mid, Wp)    all halo rows for this batch element
                                      (resident across the row-tile axis)
    out_refs : diff [, img, ero] blocks of shape (1, TH, Wp)
    """
    ks = kernel_size
    mid = ks // 2
    TH = tile_rows
    Wp = w_pad
    t = pl.program_id(1)

    rloc = jax.lax.broadcasted_iota(jnp.int32, (TH, Wp), 0)      # local row
    col = jax.lax.broadcasted_iota(jnp.int32, (TH, Wp), 1)       # column
    row_g = rloc + t * TH                                        # global row

    x_t = x_ref[0].astype(jnp.float32)                           # (TH, Wp)
    # Zero any out-of-bounds garbage lanes/rows -> exact zero-padding
    # semantics even though the wrapper never pads the arrays.
    if mask_rows and mask_cols:
        xc = jnp.where((row_g < H) & (col < W), x_t, 0.0)
    elif mask_rows:
        xc = jnp.where(row_g < H, x_t, 0.0)
    elif mask_cols:
        xc = jnp.where(col < W, x_t, 0.0)
    else:
        xc = x_t

    halo = halo_ref[t, 0].astype(jnp.float32)                    # (2*mid, Wp)

    # ---- Vertical strip of the cross: sublane rolls + halo-row corrections.
    vsum = xc
    for d in range(1, mid + 1):
        down = pltpu.roll(xc, shift=d, axis=0)        # out[i] = xc[i - d]
        up = pltpu.roll(xc, shift=TH - d, axis=0)     # out[i] = xc[i + d]
        vsum = vsum + jnp.where(rloc >= d, down, 0.0)
        vsum = vsum + jnp.where(rloc < TH - d, up, 0.0)
    for j in range(mid):
        top_row = halo[j:j + 1]                       # (1, Wp) row above tile
        bot_row = halo[mid + j:mid + j + 1]           # (1, Wp) row below tile
        vsum = vsum + jnp.where(rloc <= j, top_row, 0.0)
        vsum = vsum + jnp.where(rloc >= TH - mid + j, bot_row, 0.0)

    # ---- Horizontal strip of the cross: lane rolls (XLU).  Wrap masks are
    # only emitted when the lane padding does not already cover the radius.
    hsum = xc
    for d in range(1, mid + 1):
        right = pltpu.roll(xc, shift=d, axis=1)       # out[j] = xc[j - d]
        left = pltpu.roll(xc, shift=Wp - d, axis=1)   # out[j] = xc[j + d]
        if wrap_mask:
            hsum = hsum + jnp.where(col >= d, right, 0.0)
            hsum = hsum + jnp.where(col < Wp - d, left, 0.0)
        else:
            hsum = hsum + right + left

    # Cross-kernel convolution of x (zero padding, center counted once).
    cross = vsum + hsum - xc

    # conv(ones) on the real HxW image, analytically (exact zero-pad counts).
    vcnt = jnp.minimum(row_g, mid) + jnp.minimum((H - 1) - row_g, mid) + 1
    hcnt = jnp.minimum(col, mid) + jnp.minimum((W - 1) - col, mid) + 1
    count = (vcnt + hcnt - 1).astype(jnp.float32)

    img = cross > 0.0                         # dilation of x
    ero = (count - cross) > 0.0               # dilation of (1 - x)
    diff = img == ero                         # == (-|ero-img|+1) > 0

    out_refs[0][0] = diff.astype(out_dtype)
    if len(out_refs) == 3:
        out_refs[1][0] = img.astype(out_dtype)
        out_refs[2][0] = ero.astype(out_dtype)


def edge_mask_generator(x, kernel_size=3, return_all=False, tile_rows=None,
                        out_dtype=jnp.float32):
    """Pallas TPU implementation of EdgeMaskGenerator.forward.

    Accepts x of shape (H, W), (1, H, W) or (B, 1, H, W) with 0/1 values.
    Returns array(s) of shape (B, 1, H, W) in `out_dtype` (default float32,
    matching the PyTorch module; bf16/uint8 are lossless since values are 0/1).
    """
    x = jnp.asarray(x)
    if x.dtype == jnp.bool_:
        x = x.astype(jnp.uint8)
    elif not (jnp.issubdtype(x.dtype, jnp.floating)
              or jnp.issubdtype(x.dtype, jnp.integer)):
        x = x.astype(jnp.float32)

    shape = x.shape
    if x.ndim == 2:
        x = x.reshape(1, 1, shape[0], shape[1])
    elif x.ndim == 3:
        x = x.reshape(1, shape[0], shape[1], shape[2])
    assert x.ndim == 4
    assert x.shape[1] == 1, "Image must be single channel"
    assert kernel_size % 2 == 1, "Kernel size must be odd"
    assert kernel_size >= 3, "Kernel size must be an odd integer >= 3"
    B, _, H, W = x.shape
    assert H > kernel_size and W > kernel_size, "Image must be larger than kernel size"

    mid = kernel_size // 2
    itemsize = jnp.dtype(x.dtype).itemsize
    out_dtype = jnp.dtype(out_dtype)
    out_itemsize = out_dtype.itemsize
    row_align = 8 * max(1, 4 // itemsize)   # 8 f32, 16 16-bit, 32 8-bit dtypes
    Wp = _round_up(W, 128)                  # lane-dense block width
    n_out = 3 if return_all else 1

    # ---- VMEM-aware block budget (bytes per f32 output block). ----
    try:
        vmem_cap = int(pltpu.get_tpu_info().vmem_capacity_bytes)
    except Exception:  # pragma: no cover - conservative fallback
        vmem_cap = 64 << 20
    budget = (2 << 20) if vmem_cap <= (64 << 20) else (4 << 20)   # v7x vs v5e/v6e
    try:
        kind = jax.devices()[0].device_kind.lower()
        if "v5 lite" in kind or "v5e" in kind or "v5litepod" in kind:
            budget = 2 << 20                 # v5e: slower HBM, smaller sweet spot
    except Exception:  # pragma: no cover
        pass

    H_al = _round_up(H, row_align)
    if tile_rows is not None:
        TH = min(max(row_align, _round_up(int(tile_rows), row_align)), H_al)
    else:
        max_rows = max(row_align, (budget // (Wp * 4)) // row_align * row_align)
        n_tiles = -(-H // max_rows)
        # Keep both v7x TensorCores busy even for a single small image.
        if B * n_tiles < 2 and H >= 2 * row_align:
            n_tiles = 2
        TH = min(_round_up(-(-H // n_tiles), row_align), H_al)
    n_t = -(-H // TH)
    assert mid <= TH, "kernel_size too large for the chosen row tile"

    x_hw = x.reshape(B, H, W)

    # ---- Tiny halo rows (just above/below each row tile), gathered from x.
    # No full-image pad/copy; invalid rows (outside the image) become zeros.
    idx = np.zeros((n_t, 2 * mid), np.int32)
    valid = np.zeros((n_t, 2 * mid), np.bool_)
    for t in range(n_t):
        for k in range(mid):
            r = t * TH - mid + k
            idx[t, k] = min(max(r, 0), H - 1)
            valid[t, k] = 0 <= r < H
            r2 = (t + 1) * TH + k
            idx[t, mid + k] = min(max(r2, 0), H - 1)
            valid[t, mid + k] = 0 <= r2 < H
    halo = jnp.take(x_hw, jnp.asarray(idx.reshape(-1)), axis=1, mode="clip")
    halo = halo.reshape(B, n_t, 2 * mid, W)
    halo = jnp.where(jnp.asarray(valid)[None, :, :, None], halo,
                     jnp.zeros((), x_hw.dtype))
    halo = jnp.transpose(halo, (1, 0, 2, 3))        # (n_t, B, 2*mid, W)

    mask_rows = (n_t * TH != H)        # last row tile overhangs H
    mask_cols = (Wp != W)              # lane block overhangs W
    wrap_mask = (Wp - W) < mid         # padding does not cover the radius

    kern = functools.partial(
        _edge_mask_kernel,
        kernel_size=kernel_size, H=H, W=W, tile_rows=TH, w_pad=Wp,
        mask_rows=mask_rows, mask_cols=mask_cols, wrap_mask=wrap_mask,
        out_dtype=out_dtype)

    x_spec = pl.BlockSpec((1, TH, Wp), lambda b, t: (b, t, 0))
    # Halo block is resident across the row-tile axis (same block index for
    # every t) -> fetched once per batch element, not once per grid step.
    halo_spec = pl.BlockSpec((n_t, 1, 2 * mid, Wp), lambda b, t: (0, b, 0, 0))
    out_spec = pl.BlockSpec((1, TH, Wp), lambda b, t: (b, t, 0))

    out_shape = tuple(jax.ShapeDtypeStruct((B, H, W), out_dtype)
                      for _ in range(n_out))
    out_specs = tuple(out_spec for _ in range(n_out))

    # Explicit VMEM cap: double-buffered blocks + generous temp headroom,
    # never above (physical - 8 MiB).
    in_block = TH * Wp * itemsize
    halo_block = n_t * 2 * mid * Wp * itemsize
    out_block = TH * Wp * out_itemsize
    need = (2 * (in_block + halo_block + n_out * out_block)
            + 12 * TH * Wp * 4 + (4 << 20))
    vmem_limit = int(min(max(need, 32 << 20), max(vmem_cap - (8 << 20), 32 << 20)))

    bytes_accessed = (B * H * W * itemsize
                      + B * n_t * 2 * mid * W * itemsize
                      + n_out * B * H * W * out_itemsize)
    cost = pl.CostEstimate(flops=B * H * W * (8 * mid + 12),
                           transcendentals=0,
                           bytes_accessed=bytes_accessed)

    res = pl.pallas_call(
        kern,
        out_shape=out_shape,
        grid_spec=pltpu.PrefetchScalarGridSpec(
            num_scalar_prefetch=0,
            grid=(B, n_t),
            in_specs=[x_spec, halo_spec],
            out_specs=out_specs,
        ),
        compiler_params=pltpu.CompilerParams(
            dimension_semantics=("parallel", "parallel"),
            vmem_limit_bytes=vmem_limit),
        cost_estimate=cost,
    )(x_hw, halo)
    if not isinstance(res, (tuple, list)):
        res = (res,)

    def _shape(a):
        return a.reshape(B, 1, H, W)

    if return_all:
        return _shape(res[0]), _shape(res[1]), _shape(res[2])
    return _shape(res[0])


def _reference(x, kernel_size=3):
    """Pure-JAX reference (same math, via lax.conv) for sanity checking."""
    x = jnp.asarray(x, jnp.float32)
    mid = kernel_size // 2
    kern = jnp.zeros((kernel_size, kernel_size), jnp.float32)
    kern = kern.at[mid, :].set(1.0).at[:, mid].set(1.0)
    kern = kern.reshape(1, 1, kernel_size, kernel_size)

    def conv(img):
        return jax.lax.conv_general_dilated(
            img, kern, window_strides=(1, 1),
            padding=[(mid, mid), (mid, mid)],
            dimension_numbers=("NCHW", "OIHW", "NCHW"))

    img = (conv(x) > 0).astype(jnp.float32)
    ero = (conv(1.0 - x) > 0).astype(jnp.float32)
    diff = ((-jnp.abs(ero - img) + 1.0) > 0).astype(jnp.float32)
    return diff, img, ero


if __name__ == "__main__":
    key = jax.random.PRNGKey(0)
    k1, k2, k3 = jax.random.split(key, 3)

    # Case 1: canonical small input, kernel_size=3, diff-only fast path.
    x1 = (jax.random.uniform(k1, (2, 1, 16, 16)) > 0.5).astype(jnp.float32)
    d1 = jax.block_until_ready(edge_mask_generator(x1, kernel_size=3))
    r1, _, _ = _reference(x1, kernel_size=3)
    assert d1.shape == (2, 1, 16, 16)
    assert jnp.array_equal(d1, r1), "Pallas diff mismatch vs reference (case 1)"

    # Case 2: unaligned H/W, kernel_size=5, multiple row tiles + halo, return_all.
    x2 = (jax.random.uniform(k2, (1, 1, 40, 100)) > 0.5).astype(jnp.float32)
    d2, i2, e2 = edge_mask_generator(x2, kernel_size=5, return_all=True,
                                     tile_rows=16)
    jax.block_until_ready(d2)
    rd, ri, re = _reference(x2, kernel_size=5)
    assert jnp.array_equal(d2, rd), "Pallas diff mismatch vs reference (case 2)"
    assert jnp.array_equal(i2, ri), "Pallas img mismatch vs reference (case 2)"
    assert jnp.array_equal(e2, re), "Pallas ero mismatch vs reference (case 2)"

    # Case 3: narrow I/O path - uint8 input mask, bfloat16 output (lossless).
    x3 = (jax.random.uniform(k3, (1, 1, 24, 100)) > 0.5).astype(jnp.uint8)
    d3 = jax.block_until_ready(
        edge_mask_generator(x3, kernel_size=3, out_dtype=jnp.bfloat16))
    r3, _, _ = _reference(x3.astype(jnp.float32), kernel_size=3)
    assert d3.dtype == jnp.bfloat16
    assert jnp.array_equal(d3.astype(jnp.float32), r3), \
        "Pallas diff mismatch vs reference (case 3, bf16 output)"

    print("KERNEL_OK")
</pallas_src>

<mosaic_0001>
module attributes {stable_mosaic.version = 11 : i64} {
  func.func @_edge_mask_kernel(%arg0: i32, %arg1: i32, %arg2: memref<1x16x128xf32, #tpu.memory_space<vmem>>, %arg3: memref<1x1x2x128xf32, #tpu.memory_space<vmem>>, %arg4: memref<1x16x128xf32, #tpu.memory_space<vmem>>) attributes {dimension_semantics = [#tpu.dimension_semantics<parallel>, #tpu.dimension_semantics<parallel>], iteration_bounds = array<i64: 2, 1>, scalar_prefetch = 0 : i64, scratch_operands = 0 : i64, tpu.core_type = #tpu.core_type<tc>, window_params = [{transform_indices = @transform_0, window_bounds = array<i64: 1, 16, 128>}, {transform_indices = @transform_1, window_bounds = array<i64: 1, 1, 2, 128>}, {transform_indices = @transform_2, window_bounds = array<i64: 1, 16, 128>}]} {
    %0 = tpu.iota {dimensions = array<i32: 0>} : vector<16x128xi32>
    %1 = tpu.iota {dimensions = array<i32: 1>} : vector<16x128xi32>
    %c16_i32 = arith.constant 16 : i32
    %2 = arith.muli %arg1, %c16_i32 : i32
    %3 = vector.broadcast %2 : i32 to vector<16x128xi32>
    %4 = arith.addi %0, %3 : vector<16x128xi32>
    %c0 = arith.constant 0 : index
    %c0_0 = arith.constant 0 : index
    %c0_1 = arith.constant 0 : index
    %5 = vector.load %arg2[%c0, %c0_0, %c0_1] : memref<1x16x128xf32, #tpu.memory_space<vmem>>, vector<1x16x128xf32>
    %6 = vector.shape_cast %5 : vector<1x16x128xf32> to vector<16x128xf32>
    %c16_i32_2 = arith.constant 16 : i32
    %7 = vector.broadcast %c16_i32_2 : i32 to vector<16x128xi32>
    %8 = arith.cmpi slt, %1, %7 : vector<16x128xi32>
    %cst = arith.constant 0.000000e+00 : f32
    %9 = vector.broadcast %cst : f32 to vector<16x128xf32>
    %10 = arith.select %8, %6, %9 : vector<16x128xi1>, vector<16x128xf32>
    %11 = arith.index_cast %arg1 : i32 to index
    %c0_3 = arith.constant 0 : index
    %c0_4 = arith.constant 0 : index
    %c0_5 = arith.constant 0 : index
    %12 = vector.load %arg3[%11, %c0_3, %c0_4, %c0_5] : memref<1x1x2x128xf32, #tpu.memory_space<vmem>>, vector<1x1x2x128xf32>
    %13 = vector.shape_cast %12 : vector<1x1x2x128xf32> to vector<2x128xf32>
    %c1_i32 = arith.constant 1 : i32
    %14 = tpu.dynamic_rotate %10 by %c1_i32 dim 0 : vector<16x128xf32>, i32 -> vector<16x128xf32>
    %c15_i32 = arith.constant 15 : i32
    %15 = tpu.dynamic_rotate %10 by %c15_i32 dim 0 : vector<16x128xf32>, i32 -> vector<16x128xf32>
    %c1_i32_6 = arith.constant 1 : i32
    %16 = vector.broadcast %c1_i32_6 : i32 to vector<16x128xi32>
    %17 = arith.cmpi sge, %0, %16 : vector<16x128xi32>
    %cst_7 = arith.constant 0.000000e+00 : f32
    %18 = vector.broadcast %cst_7 : f32 to vector<16x128xf32>
    %19 = arith.select %17, %14, %18 : vector<16x128xi1>, vector<16x128xf32>
    %20 = arith.addf %10, %19 : vector<16x128xf32>
    %c15_i32_8 = arith.constant 15 : i32
    %21 = vector.broadcast %c15_i32_8 : i32 to vector<16x128xi32>
    %22 = arith.cmpi slt, %0, %21 : vector<16x128xi32>
    %cst_9 = arith.constant 0.000000e+00 : f32
    %23 = vector.broadcast %cst_9 : f32 to vector<16x128xf32>
    %24 = arith.select %22, %15, %23 : vector<16x128xi1>, vector<16x128xf32>
    %25 = arith.addf %20, %24 : vector<16x128xf32>
    %26 = vector.extract_strided_slice %13 {offsets = [0, 0], sizes = [1, 128], strides = [1, 1]} : vector<2x128xf32> to vector<1x128xf32>
    %27 = vector.extract_strided_slice %13 {offsets = [1, 0], sizes = [1, 128], strides = [1, 1]} : vector<2x128xf32> to vector<1x128xf32>
    %c0_i32 = arith.constant 0 : i32
    %28 = vector.broadcast %c0_i32 : i32 to vector<16x128xi32>
    %29 = arith.cmpi sle, %0, %28 : vector<16x128xi32>
    %cst_10 = arith.constant 0.000000e+00 : f32
    %30 = vector.shape_cast %26 : vector<1x128xf32> to vector<1x128xf32>
    %31 = vector.broadcast %30 : vector<1x128xf32> to vector<16x128xf32>
    %32 = vector.broadcast %cst_10 : f32 to vector<16x128xf32>
    %33 = arith.select %29, %31, %32 : vector<16x128xi1>, vector<16x128xf32>
    %34 = arith.addf %25, %33 : vector<16x128xf32>
    %c15_i32_11 = arith.constant 15 : i32
    %35 = vector.broadcast %c15_i32_11 : i32 to vector<16x128xi32>
    %36 = arith.cmpi sge, %0, %35 : vector<16x128xi32>
    %cst_12 = arith.constant 0.000000e+00 : f32
    %37 = vector.shape_cast %27 : vector<1x128xf32> to vector<1x128xf32>
    %38 = vector.broadcast %37 : vector<1x128xf32> to vector<16x128xf32>
    %39 = vector.broadcast %cst_12 : f32 to vector<16x128xf32>
    %40 = arith.select %36, %38, %39 : vector<16x128xi1>, vector<16x128xf32>
    %41 = arith.addf %34, %40 : vector<16x128xf32>
    %c1_i32_13 = arith.constant 1 : i32
    %42 = tpu.dynamic_rotate %10 by %c1_i32_13 dim 1 : vector<16x128xf32>, i32 -> vector<16x128xf32>
    %c127_i32 = arith.constant 127 : i32
    %43 = tpu.dynamic_rotate %10 by %c127_i32 dim 1 : vector<16x128xf32>, i32 -> vector<16x128xf32>
    %44 = arith.addf %10, %42 : vector<16x128xf32>
    %45 = arith.addf %44, %43 : vector<16x128xf32>
    %46 = arith.addf %41, %45 : vector<16x128xf32>
    %47 = arith.subf %46, %10 : vector<16x128xf32>
    %c1_i32_14 = arith.constant 1 : i32
    %48 = vector.broadcast %c1_i32_14 : i32 to vector<16x128xi32>
    %49 = arith.minsi %4, %48 : vector<16x128xi32>
    %c15_i32_15 = arith.constant 15 : i32
    %50 = vector.broadcast %c15_i32_15 : i32 to vector<16x128xi32>
    %51 = arith.subi %50, %4 : vector<16x128xi32>
    %c1_i32_16 = arith.constant 1 : i32
    %52 = vector.broadcast %c1_i32_16 : i32 to vector<16x128xi32>
    %53 = arith.minsi %51, %52 : vector<16x128xi32>
    %54 = arith.addi %49, %53 : vector<16x128xi32>
    %c1_i32_17 = arith.constant 1 : i32
    %55 = vector.broadcast %c1_i32_17 : i32 to vector<16x128xi32>
    %56 = arith.addi %54, %55 : vector<16x128xi32>
    %c1_i32_18 = arith.constant 1 : i32
    %57 = vector.broadcast %c1_i32_18 : i32 to vector<16x128xi32>
    %58 = arith.minsi %1, %57 : vector<16x128xi32>
    %c15_i32_19 = arith.constant 15 : i32
    %59 = vector.broadcast %c15_i32_19 : i32 to vector<16x128xi32>
    %60 = arith.subi %59, %1 : vector<16x128xi32>
    %c1_i32_20 = arith.constant 1 : i32
    %61 = vector.broadcast %c1_i32_20 : i32 to vector<16x128xi32>
    %62 = arith.minsi %60, %61 : vector<16x128xi32>
    %63 = arith.addi %58, %62 : vector<16x128xi32>
    %c1_i32_21 = arith.constant 1 : i32
    %64 = vector.broadcast %c1_i32_21 : i32 to vector<16x128xi32>
    %65 = arith.addi %63, %64 : vector<16x128xi32>
    %66 = arith.addi %56, %65 : vector<16x128xi32>
    %c1_i32_22 = arith.constant 1 : i32
    %67 = vector.broadcast %c1_i32_22 : i32 to vector<16x128xi32>
    %68 = arith.subi %66, %67 : vector<16x128xi32>
    %69 = arith.sitofp %68 : vector<16x128xi32> to vector<16x128xf32>
    %cst_23 = arith.constant 0.000000e+00 : f32
    %70 = vector.broadcast %cst_23 : f32 to vector<16x128xf32>
    %71 = arith.cmpf ogt, %47, %70 : vector<16x128xf32>
    %72 = arith.subf %69, %47 : vector<16x128xf32>
    %cst_24 = arith.constant 0.000000e+00 : f32
    %73 = vector.broadcast %cst_24 : f32 to vector<16x128xf32>
    %74 = arith.cmpf ogt, %72, %73 : vector<16x128xf32>
    %75 = arith.xori %71, %74 : vector<16x128xi1>
    %cst_25 = arith.constant dense<true> : vector<16x128xi1>
    %76 = arith.xori %75, %cst_25 : vector<16x128xi1>
    %77 = arith.extui %76 : vector<16x128xi1> to vector<16x128xi32>
    %78 = arith.sitofp %77 : vector<16x128xi32> to vector<16x128xf32>
    %c0_26 = arith.constant 0 : index
    %c0_27 = arith.constant 0 : index
    %c0_28 = arith.constant 0 : index
    %79 = vector.load %arg4[%c0_26, %c0_27, %c0_28] : memref<1x16x128xf32, #tpu.memory_space<vmem>>, vector<1x16x128xf32>
    %80 = vector.shape_cast %79 : vector<1x16x128xf32> to vector<16x128xf32>
    %81 = vector.shape_cast %78 : vector<16x128xf32> to vector<1x16x128xf32>
    tpu.vector_store %arg4[%c0_26, %c0_27, %c0_28], %81 {strides = array<i32>} : memref<1x16x128xf32, #tpu.memory_space<vmem>>, vector<1x16x128xf32>,
    return
  }
  func.func @transform_0(%arg0: i32, %arg1: i32) -> (i32, i32, i32) {
    %c0_i32 = arith.constant 0 : i32
    %c0_i32_0 = arith.constant 0 : i32
    return %arg0, %arg1, %c0_i32 : i32, i32, i32
  }
  func.func @transform_1(%arg0: i32, %arg1: i32) -> (i32, i32, i32, i32) {
    %c0_i32 = arith.constant 0 : i32
    %c0_i32_0 = arith.constant 0 : i32
    %c0_i32_1 = arith.constant 0 : i32
    %c0_i32_2 = arith.constant 0 : i32
    return %c0_i32, %arg0, %c0_i32_0, %c0_i32_1 : i32, i32, i32, i32
  }
  func.func @transform_2(%arg0: i32, %arg1: i32) -> (i32, i32, i32) {
    %c0_i32 = arith.constant 0 : i32
    %c0_i32_0 = arith.constant 0 : i32
    return %arg0, %arg1, %c0_i32 : i32, i32, i32
  }
}

</mosaic_0001>

<llo_original>
// kernel: tpu_custom_call.1
$region0: #{tpu_custom_call.1}
  #allocation0 [shape = 'u32[]', space=smem, size = 0x4, offset = 0x4, fixed_abs, tag = 'smem constant byte address 0x4 - core index']
  #allocation1 [shape = 'u32[144,128]{1,0:T(1,128)}', space=vmem, size = 0x12000, scoped, tag = 'internal scratch']
  %s0 = inlined_call_operand.hbm [shape: f32[2,16,16], index: 0, kind: input, shape index: {}]
  %s1 = inlined_call_operand.hbm [shape: f32[1,2,2,16], index: 1, kind: input, shape index: {}]
  %s2 = inlined_call_operand.hbm [shape: f32[2,16,16], index: 2, kind: output, shape index: {}]
  %s3 = sld [smem:[#allocation0]]
  $region49: #{tpu_custom_call.1} parent=0
    _
  %s5 = ssub.s32 1, %s3
  %s6 = scalar_select 0, %s5, %s3
  $region1: #{tpu_custom_call.1} parent=0
    #allocation2 [shape = 'u8[16384]{0}', space=vmem, size = 0x4000, scoped, tag = 'input window, operand 0']
    #allocation3 [shape = 's32[2]{0}', space=sflag, size = 0x8, scoped, tag = 'scoped memory for tpu_custom_call.1']
    #allocation4 [shape = 's32[2]{0}', space=sflag, size = 0x8, scoped, tag = 'scoped memory for tpu_custom_call.1']
    #allocation5 [shape = 'u8[2048]{0}', space=vmem, size = 0x800, scoped, tag = 'input window, operand 1']
    #allocation6 [shape = 's32[2]{0}', space=sflag, size = 0x8, scoped, tag = 'scoped memory for tpu_custom_call.1']
    #allocation7 [shape = 'u8[16384]{0}', space=vmem, size = 0x4000, scoped, tag = 'output window, operand 0']
    %7 = vsyncpa [#allocation3], 0
    %s8 = scalar_lea.sflag [#allocation3], 1
    %9 = vsyncpa %s8, 0
    %10 = vsyncpa [#allocation6], 0
    %s11 = scalar_lea.sflag [#allocation6], 1
    %12 = vsyncpa %s11, 0
    %13 = vsyncpa [#allocation4], 0
    %s14 = scalar_lea.sflag [#allocation4], 1
    %15 = vsyncpa %s14, 0
    loop: start=0, step=1, limit=4
    $region2: #{tpu_custom_call.1} parent=1 // loop_pre_header
      _
    $region3: #{tpu_custom_call.1} parent=1 // loop_header
      %s17 = sphi 0, %s21
      %p18 = scmp.ge.s32.totalorder %s17, 4
      %s24 = sphi 0, %s36
      %s25 = sphi 0, %s32
      %s26 = sphi 0, %s24
      %s27 = sphi 0, %s25
      %s28 = sphi 0, %s26
      %s29 = sphi 0, %s27
      %s41 = sphi 0, %s43
      %s44 = sphi 0, %s41
      %s45 = sphi 0, %s44
      %s61 = sphi 0, %s45
      %s67 = sphi 0, %s69
      %s70 = sphi 0, %s67
      %s71 = sphi 0, %s70
      %s87 = sphi 0, %s71
      %s95 = sphi 0, %s97
      %s98 = sphi 0, %s95
      %s99 = sphi 0, %s98
      %s115 = sphi 0, %s99
    $region4: #{tpu_custom_call.1} parent=1 // loop_header_branch
      %20 = sbr.rel (%p18) target = $region8
    $region5: #{tpu_custom_call.1} parent=1 // loop_body
      %s22 = ssub.s32 %s17, 1
      %s23 = ssub.s32 %s17, 2
      %s30 = sadd.s32 1, %s25
      %p31 = scmp.ge.s32.totalorder %s30, 1
      %s32 = scalar_select %p31, 0, %s30
      %s33 = sadd.s32 1, %s24
      %s34 = scalar_select %p31, %s33, %s24
      %p35 = scmp.ge.s32.totalorder %s34, 2
      %s36 = scalar_select %p35, 0, %s34
      %s37 = ssub.s32 %s24, %s36
      %s38 = ssub.s32 %s25, %s32
      %s39 = sor.u32 %s37, %s38
      %p40 = scmp.eq.s32.totalorder %s39, 0
      %s42 = sadd.s32 %s41, 1
      %s43 = scalar_select %p40, %s41, %s42
      %p46 = pneg %p40
      %p47 = scmp.eq.s32.totalorder %s17, 1
      %p48 = por %p46, %p47
      %p49 = scmp.ne.s32.totalorder %s41, %s44
      %p50 = scmp.eq.s32.totalorder %s17, 0
      %p51 = por %p49, %p50
      %p52 = scmp.ne.s32.totalorder %s41, %s44
      %p53 = scmp.eq.s32.totalorder %s22, 1
      %p54 = por %p52, %p53
      %p55 = scmp.ne.s32.totalorder %s44, %s45
      %p56 = scmp.eq.s32.totalorder %s22, 0
      %p57 = por %p55, %p56
      %p58 = scmp.ne.s32.totalorder %s44, %s45
      %p59 = scmp.eq.s32.totalorder %s23, 1
      %p60 = por %p58, %p59
      %p62 = scmp.ne.s32.totalorder %s45, %s61
      %p63 = scmp.eq.s32.totalorder %s23, 0
      %p64 = por %p62, %p63
      %s65 = ssub.s32 %s24, %s36
      %p66 = scmp.eq.s32.totalorder %s65, 0
      %s68 = sadd.s32 %s67, 1
      %s69 = scalar_select %p66, %s67, %s68
      %p72 = pneg %p66
      %p73 = scmp.eq.s32.totalorder %s17, 1
      %p74 = por %p72, %p73
      %p75 = scmp.ne.s32.totalorder %s67, %s70
      %p76 = scmp.eq.s32.totalorder %s17, 0
      %p77 = por %p75, %p76
      %p78 = scmp.ne.s32.totalorder %s67, %s70
      %p79 = scmp.eq.s32.totalorder %s22, 1
      %p80 = por %p78, %p79
      %p81 = scmp.ne.s32.totalorder %s70, %s71
      %p82 = scmp.eq.s32.totalorder %s22, 0
      %p83 = por %p81, %p82
      %p84 = scmp.ne.s32.totalorder %s70, %s71
      %p85 = scmp.eq.s32.totalorder %s23, 1
      %p86 = por %p84, %p85
      %p88 = scmp.ne.s32.totalorder %s71, %s87
      %p89 = scmp.eq.s32.totalorder %s23, 0
      %p90 = por %p88, %p89
      %s91 = ssub.s32 %s24, %s36
      %s92 = ssub.s32 %s25, %s32
      %s93 = sor.u32 %s91, %s92
      %p94 = scmp.eq.s32.totalorder %s93, 0
      %s96 = sadd.s32 %s95, 1
      %s97 = scalar_select %p94, %s95, %s96
      %p100 = pneg %p94
      %p101 = scmp.eq.s32.totalorder %s17, 1
      %p102 = por %p100, %p101
      %p103 = scmp.ne.s32.totalorder %s95, %s98
      %p104 = scmp.eq.s32.totalorder %s17, 0
      %p105 = por %p103, %p104
      %p106 = scmp.ne.s32.totalorder %s95, %s98
      %p107 = scmp.eq.s32.totalorder %s22, 1
      %p108 = por %p106, %p107
      %p109 = scmp.ne.s32.totalorder %s98, %s99
      %p110 = scmp.eq.s32.totalorder %s22, 0
      %p111 = por %p109, %p110
      %p112 = scmp.ne.s32.totalorder %s98, %s99
      %p113 = scmp.eq.s32.totalorder %s23, 1
      %p114 = por %p112, %p113
      %p116 = scmp.ne.s32.totalorder %s99, %s115
      %p117 = scmp.eq.s32.totalorder %s23, 0
      %p118 = por %p116, %p117
      %p119 = scmp.le.s32.totalorder 1, %s17
      %p120 = scmp.lt.s32.totalorder %s17, 3
      %p121 = pnand %p119, %p120
      %p122 = pneg %p121
      // Predicated region
      $region9: #{tpu_custom_call.1} parent=5 // pred_check
        _
      $region10: #{tpu_custom_call.1} parent=5 // pred_check_branch
        %124 = sbr.rel (%p121) target = $region12
      $region11: #{tpu_custom_call.1} parent=5 // pred_region
        %s125 = ssub.s32 %s17, 1
      $region12: #{tpu_custom_call.1} parent=5 // pred_fallthru
        _
      %p126 = scmp.lt.s32.totalorder %s17, 2
      // Predicated region
      $region13: #{tpu_custom_call.1} parent=5 // pred_check
        %p127 = pneg %p126
      $region14: #{tpu_custom_call.1} parent=5 // pred_check_branch
        %129 = sbr.rel (%p127) target = $region16
      $region15: #{tpu_custom_call.1} parent=5 // pred_region
        // Predicated region
        $region17: #{tpu_custom_call.1} parent=15 // pred_check
          %p130 = pneg %p51
        $region18: #{tpu_custom_call.1} parent=15 // pred_check_branch
          %132 = sbr.rel (%p130) target = $region20
        $region19: #{tpu_custom_call.1} parent=15 // pred_region
          %s133 = sand.u32 %s41, 1
          %s134 = scalar_lea.sflag [#allocation3], %s133
          %s135 = sand.u32 %s41, 1
          %s136 = smul.addr %s135, 16
          %s137 = scalar_lea.vmem [#allocation2], %s136
          %s138 = smul.u32 2, %s25
          %s140 = ssub.s32 256, 256
          %141 = vsyncadd %s134, %s140
          %s142 = smul.addr %s24, 2
          %s143 = sadd.s32 %s138, %s142
          %s144 = smul.addr %s143, 128
          %s145 = scalar_lea.hbm %s0, %s144
          %s146 = sshll.u32 %s137, 4
          %s147 = int_to_ptr.vmem [resolvable:$true] %s146
          %152 = dma.hbm_to_vmem [thread:$0]  %s145, 256, %s147, %s134, 128, 128, 8
        $region20: #{tpu_custom_call.1} parent=15 // pred_fallthru
          _
        // Predicated region
        $region21: #{tpu_custom_call.1} parent=15 // pred_check
          %p153 = pneg %p77
        $region22: #{tpu_custom_call.1} parent=15 // pred_check_branch
          %155 = sbr.rel (%p153) target = $region24
        $region23: #{tpu_custom_call.1} parent=15 // pred_region
          %s156 = sand.u32 %s67, 1
          %s157 = scalar_lea.sflag [#allocation6], %s156
          %s158 = sand.u32 %s67, 1
          %s159 = smul.addr %s158, 2
          %s160 = scalar_lea.vmem [#allocation5], %s159
          %s162 = ssub.s32 32, 32
          %163 = vsyncadd %s157, %s162
          %s164 = smul.addr %s24, 32
          %s165 = scalar_lea.hbm %s1, %s164
          %s167 = sshll.u32 %s160, 4
          %s168 = int_to_ptr.vmem [resolvable:$true] %s167
          %170 = dma.hbm_to_vmem [thread:$0]  %s165, 32, %s168, %s157
        $region24: #{tpu_custom_call.1} parent=15 // pred_fallthru
          _
      $region16: #{tpu_custom_call.1} parent=5 // pred_fallthru
        _
      %p171 = scmp.le.s32.totalorder 1, %s17
      %p172 = scmp.lt.s32.totalorder %s17, 3
      %p173 = pnand %p171, %p172
      %p174 = pneg %p173
      // Predicated region
      $region25: #{tpu_custom_call.1} parent=5 // pred_check
        _
      $region26: #{tpu_custom_call.1} parent=5 // pred_check_branch
        %176 = sbr.rel (%p173) target = $region28
      $region27: #{tpu_custom_call.1} parent=5 // pred_region
        %s177 = ssub.s32 %s17, 1
        %s178 = sand.u32 %s44, 1
        %s179 = scalar_lea.sflag [#allocation3], %s178
        %s180 = sand.u32 %s44, 1
        %s181 = smul.addr %s180, 16
        %s182 = scalar_lea.vmem [#allocation2], %s181
        // Predicated region
        $region29: #{tpu_custom_call.1} parent=27 // pred_check
          %p183 = pneg %p57
        $region30: #{tpu_custom_call.1} parent=27 // pred_check_branch
          %185 = sbr.rel (%p183) target = $region32
        $region31: #{tpu_custom_call.1} parent=27 // pred_region
          %186 = dma.done %s179, 256
        $region32: #{tpu_custom_call.1} parent=27 // pred_fallthru
          _
        %s187 = sand.u32 %s70, 1
        %s188 = scalar_lea.sflag [#allocation6], %s187
        %s189 = sand.u32 %s70, 1
        %s190 = smul.addr %s189, 2
        %s191 = scalar_lea.vmem [#allocation5], %s190
        // Predicated region
        $region33: #{tpu_custom_call.1} parent=27 // pred_check
          %p192 = pneg %p83
        $region34: #{tpu_custom_call.1} parent=27 // pred_check_branch
          %194 = sbr.rel (%p192) target = $region36
        $region35: #{tpu_custom_call.1} parent=27 // pred_region
          %195 = dma.done %s188, 32
        $region36: #{tpu_custom_call.1} parent=27 // pred_fallthru
          _
        %s196 = sand.u32 %s44, 1
        %s197 = scalar_lea.sflag [#allocation3], %s196
        %s198 = sand.u32 %s44, 1
        %s199 = smul.addr %s198, 16
        %s200 = scalar_lea.vmem [#allocation2], %s199
        %p201 = pneg %p57
        %p202 = pneg %p54
        %s203 = sand.u32 %s70, 1
        %s204 = scalar_lea.sflag [#allocation6], %s203
        %s205 = sand.u32 %s70, 1
        %s206 = smul.addr %s205, 2
        %s207 = scalar_lea.vmem [#allocation5], %s206
        %p208 = pneg %p83
        %p209 = pneg %p80
        %p210 = pneg %p111
        %p211 = pneg %p108
        %s212 = sand.u32 %s98, 1
        %s213 = scalar_lea.sflag [#allocation4], %s212
        %s214 = sand.u32 %s98, 1
        %s215 = smul.addr %s214, 16
        %s216 = scalar_lea.vmem [#allocation7], %s215
        %s217 = smul.u32 2, %s27
        %s218 = smul.u32 2, %s27
        %v219 = vlaneseq
        %v220 = vshrl.u32 %v219, 7
        %v221 = vadd.s32 %v220, 8
        %v222 = vlaneseq
        %v223 = vand.u32 %v222, 127
        %s224 = smul.u32 %s27, 16
        %v225 = vstv %s224
        %v226 = vadd.s32 %v220, %v225
        %v227 = vadd.s32 %v221, %v225
        %v228 = vld [vmem:[%s182] sm:$0xff]
        %v229 = vld [vmem:[%s182 + $0x8] sm:$0xff]
        %vm230 = vcmp.lt.s32.totalorder %v223, 16
        %v231 = vsel %vm230, %v228, 0.0
        %v232 = vsel %vm230, %v229, 0.0
        %s233 = smul.u32 %s27, 2
        %s234 = scalar_lea.vmem %s191, %s233 [#allocation5]
        %v235 = vld [vmem:[%s234] sm:$0x3]
        %v236 = vrot.slane %v231, 7
        %v237 = vrot.slane %v232, 7
        %vm238 = vcmp.lt.s32.totalorder %v220, 1
        %v239 = vsel %vm238, %v236, %v237
        %v240 = vsel %vm238, %v237, %v236
        %v241 = vrot.slane %v231, 1
        %v242 = vrot.slane %v232, 1
        %vm243 = vcmp.lt.s32.totalorder %v220, 7
        %v244 = vsel %vm243, %v241, %v242
        %v245 = vsel %vm243, %v242, %v241
        %vm246 = vcmp.ge.s32.totalorder %v220, 1
        %vm247 = vcmp.ge.s32.totalorder %v221, 1
        %v248 = vsel %vm246, %v240, 0.0
        %v249 = vsel %vm247, %v239, 0.0
        %v250 = vadd.f32 %v231, %v248
        %v251 = vadd.f32 %v232, %v249
        %vm252 = vcmp.lt.s32.totalorder %v220, 15
        %vm253 = vcmp.lt.s32.totalorder %v221, 15
        %v254 = vsel %vm252, %v244, 0.0
        %v255 = vsel %vm253, %v245, 0.0
        %v256 = vadd.f32 %v250, %v254
        %v257 = vadd.f32 %v251, %v255
        %vm258 = vcmp.le.s32.totalorder %v220, 0
        %vm259 = vcmp.le.s32.totalorder %v221, 0
        %v260 = vlaneseq
        %v261 = vshrl.u32 %v260, 7
        %v262 = vsub.s32 0, %v261
        %v263 = vrot.slane %v235, %v262
        %v264 = vsel %vm258, %v263, 0.0
        %v265 = vsel %vm259, %v263, 0.0
        %v266 = vadd.f32 %v256, %v264
        %v267 = vadd.f32 %v257, %v265
        %vm268 = vcmp.ge.s32.totalorder %v220, 15
        %vm269 = vcmp.ge.s32.totalorder %v221, 15
        %v270 = vlaneseq
        %v271 = vshrl.u32 %v270, 7
        %v272 = vsub.s32 1, %v271
        %v273 = vrot.slane %v235, %v272
        %v274 = vsel %vm268, %v273, 0.0
        %v275 = vsel %vm269, %v273, 0.0
        %v276 = vadd.f32 %v266, %v274
        %v277 = vadd.f32 %v267, %v275
        %278 = vrot.lane.b32.xlu0 %v231, 1
        %v279 = vpop.permute.xlu0 %278
        %280 = vrot.lane.b32.xlu0 %v232, 1
        %v281 = vpop.permute.xlu0 %280
        %282 = vrot.lane.b32.xlu0 %v231, 127
        %v283 = vpop.permute.xlu0 %282
        %284 = vrot.lane.b32.xlu0 %v232, 127
        %v285 = vpop.permute.xlu0 %284
        %v286 = vadd.f32 %v231, %v279
        %v287 = vadd.f32 %v232, %v281
        %v288 = vadd.f32 %v286, %v283
        %v289 = vadd.f32 %v287, %v285
        %v290 = vadd.f32 %v276, %v288
        %v291 = vadd.f32 %v277, %v289
        %v292 = vsub.f32 %v290, %v231
        %v293 = vsub.f32 %v291, %v232
        %vm294 = vcmp.lt.s32.totalorder %v226, 1
        %v295 = vsel %vm294, %v226, 1
        %vm296 = vcmp.lt.s32.totalorder %v227, 1
        %v297 = vsel %vm296, %v227, 1
        %v298 = vsub.s32 15, %v226
        %v299 = vsub.s32 15, %v227
        %vm300 = vcmp.lt.s32.totalorder %v298, 1
        %v301 = vsel %vm300, %v298, 1
        %vm302 = vcmp.lt.s32.totalorder %v299, 1
        %v303 = vsel %vm302, %v299, 1
        %v304 = vadd.s32 %v295, %v301
        %v305 = vadd.s32 %v297, %v303
        %v306 = vadd.s32 %v304, 1
        %v307 = vadd.s32 %v305, 1
        %vm308 = vcmp.lt.s32.totalorder %v223, 1
        %v309 = vsel %vm308, %v223, 1
        %v310 = vsub.s32 15, %v223
        %vm311 = vcmp.lt.s32.totalorder %v310, 1
        %v312 = vsel %vm311, %v310, 1
        %v313 = vadd.s32 %v309, %v312
        %v314 = vadd.s32 %v313, 1
        %v315 = vadd.s32 %v306, %v314
        %v316 = vadd.s32 %v307, %v314
        %v317 = vsub.s32 %v315, 1
        %v318 = vsub.s32 %v316, 1
        %v319 = vcvt.s32.f32 %v317
        %v320 = vcvt.s32.f32 %v318
        %vm321 = vcmp.gt.f32.partialorder %v292, 0.0
        %vm322 = vcmp.gt.f32.partialorder %v293, 0.0
        %v323 = vsub.f32 %v319, %v292
        %v324 = vsub.f32 %v320, %v293
        %vm325 = vcmp.gt.f32.partialorder %v323, 0.0
        %vm326 = vcmp.gt.f32.partialorder %v324, 0.0
        %vm327 = vmxor %vm321, %vm325
        %vm328 = vmxor %vm322, %vm326
        %vm329 = vmxor %vm327, 1
        %vm330 = vmxor %vm328, 1
        %v331 = vsel %vm329, 1, 0
        %v332 = vsel %vm330, 1, 0
        %v333 = vcvt.s32.f32 %v331
        %v334 = vcvt.s32.f32 %v332
        %335 = vst [vmem:[%s216] sm:$0xff] %v333
        %336 = vst [vmem:[%s216 + $0x8] sm:$0xff] %v334
        %s337 = sand.u32 %s98, 1
        %s338 = scalar_lea.sflag [#allocation4], %s337
        %s339 = sand.u32 %s98, 1
        %s340 = smul.addr %s339, 16
        %s341 = scalar_lea.vmem [#allocation7], %s340
        // Predicated region
        $region37: #{tpu_custom_call.1} parent=27 // pred_check
          %p342 = pneg %p108
        $region38: #{tpu_custom_call.1} parent=27 // pred_check_branch
          %344 = sbr.rel (%p342) target = $region40
        $region39: #{tpu_custom_call.1} parent=27 // pred_region
          %s345 = smul.u32 2, %s27
          %s347 = ssub.s32 256, 256
          %348 = vsyncadd %s338, %s347
          %s349 = smul.addr %s26, 2
          %s350 = sadd.s32 %s345, %s349
          %s351 = smul.addr %s350, 128
          %s352 = scalar_lea.hbm %s2, %s351
          %s353 = sshll.u32 %s341, 4
          %s354 = int_to_ptr.vmem [resolvable:$true] %s353
          %359 = dma.vmem_to_hbm [thread:$0]  %s354, 256, %s352, %s338, 128, 128, 8
        $region40: #{tpu_custom_call.1} parent=27 // pred_fallthru
          _
      $region28: #{tpu_custom_call.1} parent=5 // pred_fallthru
        _
      %p360 = scmp.le.s32.totalorder 2, %s17
      // Predicated region
      $region41: #{tpu_custom_call.1} parent=5 // pred_check
        %p361 = pneg %p360
      $region42: #{tpu_custom_call.1} parent=5 // pred_check_branch
        %363 = sbr.rel (%p361) target = $region44
      $region43: #{tpu_custom_call.1} parent=5 // pred_region
        %s364 = ssub.s32 %s17, 2
        // Predicated region
        $region45: #{tpu_custom_call.1} parent=43 // pred_check
          %p365 = pneg %p114
        $region46: #{tpu_custom_call.1} parent=43 // pred_check_branch
          %367 = sbr.rel (%p365) target = $region48
        $region47: #{tpu_custom_call.1} parent=43 // pred_region
          %s368 = sand.u32 %s99, 1
          %s369 = scalar_lea.sflag [#allocation4], %s368
          %s370 = sand.u32 %s99, 1
          %s371 = smul.addr %s370, 16
          %s372 = scalar_lea.vmem [#allocation7], %s371
          %373 = dma.done %s369, 256
        $region48: #{tpu_custom_call.1} parent=43 // pred_fallthru
          _
      $region44: #{tpu_custom_call.1} parent=5 // pred_fallthru
        _
    $region6: #{tpu_custom_call.1} parent=1 // loop_footer
      %s21 = sadd.s32 1, %s17
    $region7: #{tpu_custom_call.1} parent=1 // loop_footer_branch
      %16 = sbr.rel target = $region3
    $region8: #{tpu_custom_call.1} parent=1 // loop_exit
      _
    %374 = vsyncpa [#allocation3], 1
    %s375 = scalar_lea.sflag [#allocation3], 1
    %376 = vsyncpa %s375, 1
    %377 = vsyncpa [#allocation6], 1
    %s378 = scalar_lea.sflag [#allocation6], 1
    %379 = vsyncpa %s378, 1
    %380 = vsyncpa [#allocation4], 1
    %s381 = scalar_lea.sflag [#allocation4], 1
    %382 = vsyncpa %s381, 1

</llo_original>
